<compile_context>
chip_gen: v6e
topology: v6e:2x2x1
jax: 0.10.0
libtpu: 0.0.40
codegen_flags: <defaults>
</compile_context>

<pallas_src>
import jax
import jax.numpy as jnp
from jax.experimental import pallas as pl
from jax.experimental.pallas import tpu as pltpu


# --------------------------------------------------------------------------- #
# Kernels
# --------------------------------------------------------------------------- #
def _ffw_resident_kernel(x_ref, w1_ref, b1_ref, w2_ref, b2_ref, o_ref):
    """Weights fully resident in VMEM; one grid axis over row tiles."""
    # (tm, C) @ (C, H) -> (tm, H), f32 accumulation on the MXU.
    h = jnp.dot(x_ref[...], w1_ref[...], preferred_element_type=jnp.float32)
    h = jnp.maximum(h + b1_ref[...], 0.0)                 # bias + ReLU in f32 (VPU)
    # (tm, H) @ (H, C) -> (tm, C); fold +b2 and the cast, store straight to output.
    y = jnp.dot(h.astype(w2_ref.dtype), w2_ref[...],
                preferred_element_type=jnp.float32)
    o_ref[...] = (y + b2_ref[...]).astype(o_ref.dtype)


def _ffw_stream_kernel(x_ref, w1_ref, b1_ref, w2_ref, b2_ref, o_ref, acc_ref):
    """Fallback: hidden dim streamed in th-wide slices, f32 accumulator in VMEM."""
    hk = pl.program_id(1)
    nh = pl.num_programs(1)

    h = jnp.dot(x_ref[...], w1_ref[...], preferred_element_type=jnp.float32)
    h = jnp.maximum(h + b1_ref[...], 0.0)
    partial = jnp.dot(h.astype(w2_ref.dtype), w2_ref[...],
                      preferred_element_type=jnp.float32)

    @pl.when(hk == 0)
    def _():
        acc_ref[...] = jnp.zeros_like(acc_ref)

    @pl.when(hk < nh - 1)
    def _():
        acc_ref[...] += partial

    @pl.when(hk == nh - 1)
    def _():
        # Fold the last partial, +b2 and the cast directly into the output store.
        o_ref[...] = (acc_ref[...] + partial + b2_ref[...]).astype(o_ref.dtype)


# --------------------------------------------------------------------------- #
# Tiling helpers
# --------------------------------------------------------------------------- #
def _round_up(n, m):
    return ((n + m - 1) // m) * m


def _pick_tm(M, tm_target):
    """Row tile: multiple of 128; prefer exact divisors of M (pad/slice become
    no-ops) with >=2 tiles so the 'parallel' M axis can feed both TCs (v7x)."""
    tm_target = max(128, _round_up(tm_target, 128))
    Mr = _round_up(M, 128)
    if Mr <= tm_target:
        return Mr                       # tiny M: one (possibly padded) >=128-row tile
    for cand in range(tm_target, 127, -128):
        if M % cand == 0 and M // cand >= 2:
            return cand                 # exact divisor of M
    return tm_target                    # fall back: padded last tile


def _pick_th(H, th_request):
    """Hidden tile for the streaming path: 128-multiple dividing H."""
    th = min(th_request, H)
    th = max(128, (th // 128) * 128)
    while H % th != 0 and th > 128:
        th -= 128
    if H % th != 0:
        th = H
    return th


# --------------------------------------------------------------------------- #
# Wrapper
# --------------------------------------------------------------------------- #
def feedforward(x, w1, b1, w2, b2, *, tm=512, th=None,
                compute_dtype=jnp.bfloat16, out_dtype=None):
    """y = relu(x @ W1 + b1) @ W2 + b2.  x: (B, T, C); W1: (C, 4C); W2: (4C, C)."""
    B, T, C = x.shape
    H = w1.shape[1]
    M = B * T
    out_dtype = out_dtype if out_dtype is not None else x.dtype
    cbytes = jnp.dtype(compute_dtype).itemsize
    obytes = jnp.dtype(out_dtype).itemsize

    tm = _pick_tm(M, tm)
    Mp = _round_up(M, tm)

    # Weight residency decision: keep W1/W2 resident unless they (plus the (tm,H)
    # intermediates) would blow the VMEM budget, or the caller forces streaming.
    weight_bytes = 2 * C * H * cbytes
    want_stream = th is not None and th < H
    resident = (not want_stream) and (
        2 * weight_bytes + tm * H * (4 + cbytes) <= (24 << 20))
    th_eff = None
    if not resident:
        th_eff = _pick_th(H, th if th is not None else 512)
        if th_eff >= H:                 # nothing left to stream
            resident = True

    # Inputs for the kernel (avoid redundant HBM passes when dtypes already match
    # and when Mp == M).
    x2 = x.reshape(M, C)
    if x2.dtype != compute_dtype:
        x2 = x2.astype(compute_dtype)
    if Mp != M:
        x2 = jnp.pad(x2, ((0, Mp - M), (0, 0)))
    w1c = w1 if w1.dtype == compute_dtype else w1.astype(compute_dtype)
    w2c = w2 if w2.dtype == compute_dtype else w2.astype(compute_dtype)
    b1_2d = b1.reshape(1, H).astype(jnp.float32)
    b2_2d = b2.reshape(1, C).astype(jnp.float32)

    if resident:
        vmem_bytes = (
            2 * tm * C * cbytes              # x tile (double-buffered)
            + 2 * tm * C * obytes            # out tile (double-buffered)
            + 2 * weight_bytes               # W1 + W2 (budget 2 buffers)
            + 4 * (H + C) * 4                # biases (f32)
            + tm * H * 4                     # f32 intermediate h
            + tm * H * cbytes                # bf16 copy of h for 2nd matmul
        )
        vmem_limit = int(max(24 << 20, min(vmem_bytes * 3 // 2 + (4 << 20), 48 << 20)))
        out = pl.pallas_call(
            _ffw_resident_kernel,
            out_shape=jax.ShapeDtypeStruct((Mp, C), out_dtype),
            grid_spec=pltpu.PrefetchScalarGridSpec(
                num_scalar_prefetch=0,
                grid=(Mp // tm,),
                in_specs=[
                    pl.BlockSpec((tm, C), lambda i: (i, 0)),   # x row tile
                    pl.BlockSpec((C, H), lambda i: (0, 0)),    # W1 (resident)
                    pl.BlockSpec((1, H), lambda i: (0, 0)),    # b1 (resident)
                    pl.BlockSpec((H, C), lambda i: (0, 0)),    # W2 (resident)
                    pl.BlockSpec((1, C), lambda i: (0, 0)),    # b2 (resident)
                ],
                out_specs=pl.BlockSpec((tm, C), lambda i: (i, 0)),
            ),
            compiler_params=pltpu.CompilerParams(
                dimension_semantics=("parallel",),
                vmem_limit_bytes=vmem_limit,
            ),
        )(x2, w1c, b1_2d, w2c, b2_2d)
    else:
        th = th_eff
        vmem_bytes = (
            2 * tm * C * cbytes
            + 2 * tm * C * obytes
            + 2 * (C * th + th * C) * cbytes   # streamed W1/W2 slices (double-buffered)
            + 4 * (th + C) * 4                 # biases
            + tm * th * 4                      # f32 intermediate h
            + tm * th * cbytes                 # bf16 copy of h
            + tm * C * 4                       # f32 accumulator scratch
        )
        vmem_limit = int(max(24 << 20, min(vmem_bytes * 3 // 2 + (4 << 20), 48 << 20)))
        out = pl.pallas_call(
            _ffw_stream_kernel,
            out_shape=jax.ShapeDtypeStruct((Mp, C), out_dtype),
            grid_spec=pltpu.PrefetchScalarGridSpec(
                num_scalar_prefetch=0,
                grid=(Mp // tm, H // th),
                in_specs=[
                    pl.BlockSpec((tm, C), lambda i, hk: (i, 0)),   # x row tile
                    pl.BlockSpec((C, th), lambda i, hk: (0, hk)),  # W1 column slice
                    pl.BlockSpec((1, th), lambda i, hk: (0, hk)),  # b1 slice
                    pl.BlockSpec((th, C), lambda i, hk: (hk, 0)),  # W2 row slice
                    pl.BlockSpec((1, C), lambda i, hk: (0, 0)),    # b2 (full)
                ],
                out_specs=pl.BlockSpec((tm, C), lambda i, hk: (i, 0)),
                scratch_shapes=[pltpu.VMEM((tm, C), jnp.float32)],
            ),
            compiler_params=pltpu.CompilerParams(
                dimension_semantics=("parallel", "arbitrary"),
                vmem_limit_bytes=vmem_limit,
            ),
        )(x2, w1c, b1_2d, w2c, b2_2d)

    if Mp != M:
        out = out[:M]
    return out.reshape(B, T, C)


# --------------------------------------------------------------------------- #
# Test
# --------------------------------------------------------------------------- #
if __name__ == "__main__":
    # Small shapes consistent with the module: (B, T, n_embd) input to the MLP.
    B, T, C = 2, 8, 128          # n_embd = 128 (small stand-in for 384)
    H = 4 * C                    # hidden = 4 * n_embd

    key = jax.random.PRNGKey(0)
    kx, kw1, kb1, kw2, kb2 = jax.random.split(key, 5)

    x = jax.random.normal(kx, (B, T, C), dtype=jnp.float32)
    # Deterministic parameter init (torch.nn.Linear-like uniform bounds).
    bound1 = 1.0 / (C ** 0.5)
    bound2 = 1.0 / (H ** 0.5)
    w1 = jax.random.uniform(kw1, (C, H), jnp.float32, -bound1, bound1)
    b1 = jax.random.uniform(kb1, (H,), jnp.float32, -bound1, bound1)
    w2 = jax.random.uniform(kw2, (H, C), jnp.float32, -bound2, bound2)
    b2 = jax.random.uniform(kb2, (C,), jnp.float32, -bound2, bound2)

    # Path 1: default (weights VMEM-resident, single grid axis over row tiles).
    y_resident = jax.block_until_ready(feedforward(x, w1, b1, w2, b2))
    # Path 2: forced H-streaming fallback (exercises the accumulator path).
    y_stream = jax.block_until_ready(feedforward(x, w1, b1, w2, b2, tm=128, th=128))

    # Reference with matching bf16 matmul inputs / f32 accumulation.
    xb = x.reshape(-1, C).astype(jnp.bfloat16)
    w1b = w1.astype(jnp.bfloat16)
    w2b = w2.astype(jnp.bfloat16)
    h_ref = jnp.maximum(
        jnp.dot(xb, w1b, preferred_element_type=jnp.float32) + b1, 0.0)
    ref = (jnp.dot(h_ref.astype(jnp.bfloat16), w2b,
                   preferred_element_type=jnp.float32) + b2)
    ref = ref.reshape(B, T, C).astype(x.dtype)

    # Pure-f32 reference for a looser sanity check (bf16 rounding tolerance).
    ref_f32 = (jnp.maximum(x.reshape(-1, C) @ w1 + b1, 0.0) @ w2 + b2).reshape(B, T, C)

    assert y_resident.shape == (B, T, C)
    assert y_stream.shape == (B, T, C)
    assert jnp.allclose(y_resident, ref, atol=2e-2, rtol=2e-2), \
        "mismatch vs bf16 reference (resident path)"
    assert jnp.allclose(y_stream, ref, atol=2e-2, rtol=2e-2), \
        "mismatch vs bf16 reference (streaming path)"
    assert jnp.allclose(y_resident, y_stream, atol=2e-2, rtol=2e-2), \
        "resident vs streaming path mismatch"
    assert jnp.allclose(y_resident, ref_f32, atol=5e-2, rtol=5e-2), \
        "mismatch vs f32 reference"

    print("KERNEL_OK")
</pallas_src>

<mosaic_0001>
module attributes {stable_mosaic.version = 11 : i64} {
  func.func @_ffw_resident_kernel(%arg0: i32, %arg1: memref<128x128xbf16, #tpu.memory_space<vmem>>, %arg2: memref<128x512xbf16, #tpu.memory_space<vmem>>, %arg3: memref<1x512xf32, #tpu.memory_space<vmem>>, %arg4: memref<512x128xbf16, #tpu.memory_space<vmem>>, %arg5: memref<1x128xf32, #tpu.memory_space<vmem>>, %arg6: memref<128x128xf32, #tpu.memory_space<vmem>>) attributes {dimension_semantics = [#tpu.dimension_semantics<parallel>], iteration_bounds = array<i64: 1>, scalar_prefetch = 0 : i64, scratch_operands = 0 : i64, tpu.core_type = #tpu.core_type<tc>, window_params = [{transform_indices = @transform_0, window_bounds = array<i64: 128, 128>}, {pipeline_mode = #tpu.pipeline_mode<synchronous>, transform_indices = @transform_1, window_bounds = array<i64: 128, 512>}, {pipeline_mode = #tpu.pipeline_mode<synchronous>, transform_indices = @transform_2, window_bounds = array<i64: 1, 512>}, {pipeline_mode = #tpu.pipeline_mode<synchronous>, transform_indices = @transform_3, window_bounds = array<i64: 512, 128>}, {pipeline_mode = #tpu.pipeline_mode<synchronous>, transform_indices = @transform_4, window_bounds = array<i64: 1, 128>}, {transform_indices = @transform_5, window_bounds = array<i64: 128, 128>}]} {
    %c0 = arith.constant 0 : index
    %c0_0 = arith.constant 0 : index
    %0 = vector.load %arg1[%c0, %c0_0] : memref<128x128xbf16, #tpu.memory_space<vmem>>, vector<128x128xbf16>
    %c0_1 = arith.constant 0 : index
    %c0_2 = arith.constant 0 : index
    %1 = vector.load %arg2[%c0_1, %c0_2] : memref<128x512xbf16, #tpu.memory_space<vmem>>, vector<128x512xbf16>
    %cst = arith.constant dense<0.000000e+00> : vector<128x512xf32>
    %2 = tpu.matmul %0, %1, %cst {dimension_numbers = #tpu.dot_dimension_numbers<[1], [0], [0], [1], [0, 0, 1, 1], [], []>} : vector<128x128xbf16>, vector<128x512xbf16>, vector<128x512xf32> -> vector<128x512xf32>
    %c0_3 = arith.constant 0 : index
    %c0_4 = arith.constant 0 : index
    %3 = vector.load %arg3[%c0_3, %c0_4] : memref<1x512xf32, #tpu.memory_space<vmem>>, vector<1x512xf32>
    %4 = vector.broadcast %3 : vector<1x512xf32> to vector<128x512xf32>
    %5 = arith.addf %2, %4 : vector<128x512xf32>
    %cst_5 = arith.constant 0.000000e+00 : f32
    %6 = vector.broadcast %cst_5 : f32 to vector<128x512xf32>
    %7 = arith.maximumf %5, %6 : vector<128x512xf32>
    %8 = arith.truncf %7 : vector<128x512xf32> to vector<128x512xbf16>
    %c0_6 = arith.constant 0 : index
    %c0_7 = arith.constant 0 : index
    %9 = vector.load %arg4[%c0_6, %c0_7] : memref<512x128xbf16, #tpu.memory_space<vmem>>, vector<512x128xbf16>
    %cst_8 = arith.constant dense<0.000000e+00> : vector<128x128xf32>
    %10 = tpu.matmul %8, %9, %cst_8 {dimension_numbers = #tpu.dot_dimension_numbers<[1], [0], [0], [1], [0, 0, 1, 1], [], []>} : vector<128x512xbf16>, vector<512x128xbf16>, vector<128x128xf32> -> vector<128x128xf32>
    %c0_9 = arith.constant 0 : index
    %c0_10 = arith.constant 0 : index
    %11 = vector.load %arg5[%c0_9, %c0_10] : memref<1x128xf32, #tpu.memory_space<vmem>>, vector<1x128xf32>
    %12 = vector.broadcast %11 : vector<1x128xf32> to vector<128x128xf32>
    %13 = arith.addf %10, %12 : vector<128x128xf32>
    %c0_11 = arith.constant 0 : index
    %c0_12 = arith.constant 0 : index
    %14 = vector.load %arg6[%c0_11, %c0_12] : memref<128x128xf32, #tpu.memory_space<vmem>>, vector<128x128xf32>
    tpu.vector_store %arg6[%c0_11, %c0_12], %13 {strides = array<i32>} : memref<128x128xf32, #tpu.memory_space<vmem>>, vector<128x128xf32>,
    return
  }
  func.func @transform_0(%arg0: i32) -> (i32, i32) {
    %c0_i32 = arith.constant 0 : i32
    %c0_i32_0 = arith.constant 0 : i32
    return %arg0, %c0_i32 : i32, i32
  }
  func.func @transform_1(%arg0: i32) -> (i32, i32) {
    %c0_i32 = arith.constant 0 : i32
    %c0_i32_0 = arith.constant 0 : i32
    %c0_i32_1 = arith.constant 0 : i32
    return %c0_i32, %c0_i32_0 : i32, i32
  }
  func.func @transform_2(%arg0: i32) -> (i32, i32) {
    %c0_i32 = arith.constant 0 : i32
    %c0_i32_0 = arith.constant 0 : i32
    %c0_i32_1 = arith.constant 0 : i32
    return %c0_i32, %c0_i32_0 : i32, i32
  }
  func.func @transform_3(%arg0: i32) -> (i32, i32) {
    %c0_i32 = arith.constant 0 : i32
    %c0_i32_0 = arith.constant 0 : i32
    %c0_i32_1 = arith.constant 0 : i32
    return %c0_i32, %c0_i32_0 : i32, i32
  }
  func.func @transform_4(%arg0: i32) -> (i32, i32) {
    %c0_i32 = arith.constant 0 : i32
    %c0_i32_0 = arith.constant 0 : i32
    %c0_i32_1 = arith.constant 0 : i32
    return %c0_i32, %c0_i32_0 : i32, i32
  }
  func.func @transform_5(%arg0: i32) -> (i32, i32) {
    %c0_i32 = arith.constant 0 : i32
    %c0_i32_0 = arith.constant 0 : i32
    return %arg0, %c0_i32 : i32, i32
  }
}

</mosaic_0001>

<llo_original>
// kernel: tpu_custom_call.1
$region0: #{tpu_custom_call.1}
  #allocation0 [shape = 'u32[]', space=smem, size = 0x4, offset = 0x4, fixed_abs, tag = 'smem constant byte address 0x4 - core index']
  #allocation1 [shape = 'u32[144,128]{1,0:T(1,128)}', space=vmem, size = 0x12000, scoped, tag = 'internal scratch']
  %s0 = inlined_call_operand.hbm [shape: bf16[128,128], index: 0, kind: input, shape index: {}]
  %s1 = inlined_call_operand.hbm [shape: bf16[128,512], index: 1, kind: input, shape index: {}]
  %s2 = inlined_call_operand.hbm [shape: f32[1,512], index: 2, kind: input, shape index: {}]
  %s3 = inlined_call_operand.hbm [shape: bf16[512,128], index: 3, kind: input, shape index: {}]
  %s4 = inlined_call_operand.vmem [shape: f32[1,128], index: 4, kind: input, shape index: {}]
  %s5 = inlined_call_operand.hbm [shape: f32[128,128], index: 5, kind: output, shape index: {}]
  %s6 = sld [smem:[#allocation0]]
  $region46: #{tpu_custom_call.1} parent=0
    _
  %s8 = ssub.s32 1, %s6
  %s9 = scalar_select 0, %s8, %s6
  $region1: #{tpu_custom_call.1} parent=0
    #allocation2 [shape = 'u8[32768]{0}', space=vmem, size = 0x8000, scoped, tag = 'input window, operand 0, single buffered']
    #allocation3 [shape = 's32[1]{0}', space=sflag, size = 0x4, scoped, tag = 'scoped memory for tpu_custom_call.1']
    #allocation4 [shape = 's32[1]{0}', space=sflag, size = 0x4, scoped, tag = 'scoped memory for tpu_custom_call.1']
    #allocation5 [shape = 'u8[131072]{0}', space=vmem, size = 0x20000, scoped, tag = 'input window, operand 1, single buffered']
    #allocation6 [shape = 's32[1]{0}', space=sflag, size = 0x4, scoped, tag = 'scoped memory for tpu_custom_call.1']
    #allocation7 [shape = 'u8[2048]{0}', space=vmem, size = 0x800, scoped, tag = 'input window, operand 2, single buffered']
    #allocation8 [shape = 'u8[131072]{0}', space=vmem, size = 0x20000, scoped, tag = 'input window, operand 3, single buffered']
    #allocation9 [shape = 's32[1]{0}', space=sflag, size = 0x4, scoped, tag = 'scoped memory for tpu_custom_call.1']
    #allocation10 [shape = 'u8[65536]{0}', space=vmem, size = 0x10000, scoped, tag = 'output window, operand 0, single buffered']
    %10 = vsyncpa [#allocation3], 0
    %11 = vsyncpa [#allocation6], 0
    %12 = vsyncpa [#allocation9], 0
    %13 = vsyncpa [#allocation4], 0
    // Predicated region
    $region2: #{tpu_custom_call.1} parent=1 // pred_check
      _
    $region3: #{tpu_custom_call.1} parent=1 // pred_check_branch
      %15 = sbr.rel (0) target = $region5
    $region4: #{tpu_custom_call.1} parent=1 // pred_region
      %s17 = ssub.s32 1024, 1024
      %18 = vsyncadd [#allocation3], %s17
      %s19 = sshll.u32 [#allocation2], 4
      %s20 = int_to_ptr.vmem [resolvable:$true] %s19
      %25 = dma.hbm_to_vmem [thread:$0]  %s0, 1024, %s20, [#allocation3], 64, 64, 4
    $region5: #{tpu_custom_call.1} parent=1 // pred_fallthru
      _
    // Predicated region
    $region6: #{tpu_custom_call.1} parent=1 // pred_check
      _
    $region7: #{tpu_custom_call.1} parent=1 // pred_check_branch
      %27 = sbr.rel (0) target = $region9
    $region8: #{tpu_custom_call.1} parent=1 // pred_region
      %s29 = ssub.s32 4096, 4096
      %30 = vsyncadd [#allocation6], %s29
      %s31 = sshll.u32 [#allocation5], 4
      %s32 = int_to_ptr.vmem [resolvable:$true] %s31
      %37 = dma.hbm_to_vmem [thread:$0]  %s1, 4096, %s32, [#allocation6], 256, 256, 16
    $region9: #{tpu_custom_call.1} parent=1 // pred_fallthru
      _
    // Predicated region
    $region10: #{tpu_custom_call.1} parent=1 // pred_check
      _
    $region11: #{tpu_custom_call.1} parent=1 // pred_check_branch
      %39 = sbr.rel (0) target = $region13
    $region12: #{tpu_custom_call.1} parent=1 // pred_region
      %s41 = ssub.s32 64, 64
      %42 = vsyncadd [#allocation6], %s41
      %s44 = sshll.u32 [#allocation7], 4
      %s45 = int_to_ptr.vmem [resolvable:$true] %s44
      %47 = dma.hbm_to_vmem [thread:$0]  %s2, 64, %s45, [#allocation6]
    $region13: #{tpu_custom_call.1} parent=1 // pred_fallthru
      _
    // Predicated region
    $region14: #{tpu_custom_call.1} parent=1 // pred_check
      _
    $region15: #{tpu_custom_call.1} parent=1 // pred_check_branch
      %49 = sbr.rel (0) target = $region17
    $region16: #{tpu_custom_call.1} parent=1 // pred_region
      %s51 = ssub.s32 4096, 4096
      %52 = vsyncadd [#allocation9], %s51
      %s53 = sshll.u32 [#allocation8], 4
      %s54 = int_to_ptr.vmem [resolvable:$true] %s53
      %59 = dma.hbm_to_vmem [thread:$0]  %s3, 4096, %s54, [#allocation9], 64, 64, 4
    $region17: #{tpu_custom_call.1} parent=1 // pred_fallthru
      _
    // Predicated region
    $region18: #{tpu_custom_call.1} parent=1 // pred_check
      _
    $region19: #{tpu_custom_call.1} parent=1 // pred_check_branch
      %61 = sbr.rel (0) target = $region21
    $region20: #{tpu_custom_call.1} parent=1 // pred_region
      _
    $region21: #{tpu_custom_call.1} parent=1 // pred_fallthru
      _
    // Predicated region
    $region22: #{tpu_custom_call.1} parent=1 // pred_check
      _
    $region23: #{tpu_custom_call.1} parent=1 // pred_check_branch
      %63 = sbr.rel (0) target = $region25
    $region24: #{tpu_custom_call.1} parent=1 // pred_region
      %64 = dma.done [#allocation3], 1024
    $region25: #{tpu_custom_call.1} parent=1 // pred_fallthru
      _
    // Predicated region
    $region26: #{tpu_custom_call.1} parent=1 // pred_check
      _
    $region27: #{tpu_custom_call.1} parent=1 // pred_check_branch
      %66 = sbr.rel (0) target = $region29
    $region28: #{tpu_custom_call.1} parent=1 // pred_region
      %67 = dma.done [#allocation6], 4096
    $region29: #{tpu_custom_call.1} parent=1 // pred_fallthru
      _
    // Predicated region
    $region30: #{tpu_custom_call.1} parent=1 // pred_check
      _
    $region31: #{tpu_custom_call.1} parent=1 // pred_check_branch
      %69 = sbr.rel (0) target = $region33
    $region32: #{tpu_custom_call.1} parent=1 // pred_region
      %70 = dma.done [#allocation6], 64
    $region33: #{tpu_custom_call.1} parent=1 // pred_fallthru
      _
    // Predicated region
    $region34: #{tpu_custom_call.1} parent=1 // pred_check
      _
    $region35: #{tpu_custom_call.1} parent=1 // pred_check_branch
      %72 = sbr.rel (0) target = $region37
    $region36: #{tpu_custom_call.1} parent=1 // pred_region
      %73 = dma.done [#allocation9], 4096
    $region37: #{tpu_custom_call.1} parent=1 // pred_fallthru
      _
    %v75 = vld [vmem:[#allocation2] sm:$0xf]
    %v76 = vld [vmem:[#allocation2 + $0x4] sm:$0xf]
    %v77 = vld [vmem:[#allocation2 + $0x8] sm:$0xf]
    %v78 = vld [vmem:[#allocation2 + $0xc] sm:$0xf]
    %v79 = vld [vmem:[#allocation2 + $0x10] sm:$0xf]
    %v80 = vld [vmem:[#allocation2 + $0x14] sm:$0xf]
    %v81 = vld [vmem:[#allocation2 + $0x18] sm:$0xf]
    %v82 = vld [vmem:[#allocation2 + $0x1c] sm:$0xf]
    %v83 = vld [vmem:[#allocation2 + $0x20] sm:$0xf]
    %v84 = vld [vmem:[#allocation2 + $0x24] sm:$0xf]
    %v85 = vld [vmem:[#allocation2 + $0x28] sm:$0xf]
    %v86 = vld [vmem:[#allocation2 + $0x2c] sm:$0xf]
    %v87 = vld [vmem:[#allocation2 + $0x30] sm:$0xf]
    %v88 = vld [vmem:[#allocation2 + $0x34] sm:$0xf]
    %v89 = vld [vmem:[#allocation2 + $0x38] sm:$0xf]
    %v90 = vld [vmem:[#allocation2 + $0x3c] sm:$0xf]
    %v91 = vld [vmem:[#allocation5] sm:$0xff]
    %v92 = vld [vmem:[#allocation5 + $0x8] sm:$0xff]
    %v93 = vld [vmem:[#allocation5 + $0x10] sm:$0xff]
    %v94 = vld [vmem:[#allocation5 + $0x18] sm:$0xff]
    %v95 = vld [vmem:[#allocation5 + $0x20] sm:$0xff]
    %v96 = vld [vmem:[#allocation5 + $0x28] sm:$0xff]
    %v97 = vld [vmem:[#allocation5 + $0x30] sm:$0xff]
    %v98 = vld [vmem:[#allocation5 + $0x38] sm:$0xff]
    %v99 = vld [vmem:[#allocation5 + $0x40] sm:$0xff]
    %v100 = vld [vmem:[#allocation5 + $0x48] sm:$0xff]
    %v101 = vld [vmem:[#allocation5 + $0x50] sm:$0xff]
    %v102 = vld [vmem:[#allocation5 + $0x58] sm:$0xff]
    %v103 = vld [vmem:[#allocation5 + $0x60] sm:$0xff]
    %v104 = vld [vmem:[#allocation5 + $0x68] sm:$0xff]
    %v105 = vld [vmem:[#allocation5 + $0x70] sm:$0xff]
    %v106 = vld [vmem:[#allocation5 + $0x78] sm:$0xff]
    %v107 = vld [vmem:[#allocation5 + $0x80] sm:$0xff]
    %v108 = vld [vmem:[#allocation5 + $0x88] sm:$0xff]
    %v109 = vld [vmem:[#allocation5 + $0x90] sm:$0xff]
    %v110 = vld [vmem:[#allocation5 + $0x98] sm:$0xff]
    %v111 = vld [vmem:[#allocation5 + $0xa0] sm:$0xff]
    %v112 = vld [vmem:[#allocation5 + $0xa8] sm:$0xff]
    %v113 = vld [vmem:[#allocation5 + $0xb0] sm:$0xff]
    %v114 = vld [vmem:[#allocation5 + $0xb8] sm:$0xff]
    %v115 = vld [vmem:[#allocation5 + $0xc0] sm:$0xff]
    %v116 = vld [vmem:[#allocation5 + $0xc8] sm:$0xff]
    %v117 = vld [vmem:[#allocation5 + $0xd0] sm:$0xff]
    %v118 = vld [vmem:[#allocation5 + $0xd8] sm:$0xff]
    %v119 = vld [vmem:[#allocation5 + $0xe0] sm:$0xff]
    %v120 = vld [vmem:[#allocation5 + $0xe8] sm:$0xff]
    %v121 = vld [vmem:[#allocation5 + $0xf0] sm:$0xff]
    %v122 = vld [vmem:[#allocation5 + $0xf8] sm:$0xff]
    %v123 = vld [vmem:[#allocation7] sm:$0xf]
    %v125 = vlaneseq
    %v126 = vshrl.u32 %v125, 7
    %v127 = vsub.s32 0, %v126
    %v128 = vrot.slane %v123, %v127
    %v129 = vlaneseq
    %v130 = vshrl.u32 %v129, 7
    %v131 = vsub.s32 1, %v130
    %v132 = vrot.slane %v123, %v131
    %v133 = vlaneseq
    %v134 = vshrl.u32 %v133, 7
    %v135 = vsub.s32 2, %v134
    %v136 = vrot.slane %v123, %v135
    %v137 = vlaneseq
    %v138 = vshrl.u32 %v137, 7
    %v139 = vsub.s32 3, %v138
    %v140 = vrot.slane %v123, %v139
    %v161 = vunpack.c.l.b16 %v75
    %v162 = vunpack.c.l.b16 %v76
    %v163 = vunpack.c.l.b16 %v77
    %v164 = vunpack.c.l.b16 %v78
    %v165 = vunpack.c.l.b16 %v79
    %v166 = vunpack.c.l.b16 %v80
    %v167 = vunpack.c.l.b16 %v81
    %v168 = vunpack.c.l.b16 %v82
    %v169 = vunpack.c.l.b16 %v83
    %v170 = vunpack.c.l.b16 %v84
    %v171 = vunpack.c.l.b16 %v85
    %v172 = vunpack.c.l.b16 %v86
    %v173 = vunpack.c.l.b16 %v87
    %v174 = vunpack.c.l.b16 %v88
    %v175 = vunpack.c.l.b16 %v89
    %v176 = vunpack.c.l.b16 %v90
    %v177 = vpack.c.b16 %v162, %v161
    %v178 = vpack.c.b16 %v164, %v163
    %v179 = vpack.c.b16 %v166, %v165
    %v180 = vpack.c.b16 %v168, %v167
    %v181 = vpack.c.b16 %v170, %v169
    %v182 = vpack.c.b16 %v172, %v171
    %v183 = vpack.c.b16 %v174, %v173
    %v184 = vpack.c.b16 %v176, %v175
    %v225 = vunpack.c.l.b16 %v91
    %v226 = vunpack.c.h.b16 %v91
    %v227 = vunpack.c.l.b16 %v92
    %v228 = vunpack.c.h.b16 %v92
    %v229 = vunpack.c.l.b16 %v93
    %v230 = vunpack.c.h.b16 %v93
    %v231 = vunpack.c.l.b16 %v94
    %v232 = vunpack.c.h.b16 %v94
    %v233 = vunpack.c.l.b16 %v95
    %v234 = vunpack.c.h.b16 %v95
    %v235 = vunpack.c.l.b16 %v96
    %v236 = vunpack.c.h.b16 %v96
    %v237 = vunpack.c.l.b16 %v97
    %v238 = vunpack.c.h.b16 %v97
    %v239 = vunpack.c.l.b16 %v98
    %v240 = vunpack.c.h.b16 %v98
    %v241 = vunpack.c.l.b16 %v99
    %v242 = vunpack.c.h.b16 %v99
    %v243 = vunpack.c.l.b16 %v100
    %v244 = vunpack.c.h.b16 %v100
    %v245 = vunpack.c.l.b16 %v101
    %v246 = vunpack.c.h.b16 %v101
    %v247 = vunpack.c.l.b16 %v102
    %v248 = vunpack.c.h.b16 %v102
    %v249 = vunpack.c.l.b16 %v103
    %v250 = vunpack.c.h.b16 %v103
    %v251 = vunpack.c.l.b16 %v104
    %v252 = vunpack.c.h.b16 %v104
    %v253 = vunpack.c.l.b16 %v105
    %v254 = vunpack.c.h.b16 %v105
    %v255 = vunpack.c.l.b16 %v106
    %v256 = vunpack.c.h.b16 %v106
    %v257 = vunpack.c.l.b16 %v107
    %v258 = vunpack.c.h.b16 %v107
    %v259 = vunpack.c.l.b16 %v108
    %v260 = vunpack.c.h.b16 %v108
    %v261 = vunpack.c.l.b16 %v109
    %v262 = vunpack.c.h.b16 %v109
    %v263 = vunpack.c.l.b16 %v110
    %v264 = vunpack.c.h.b16 %v110
    %v265 = vunpack.c.l.b16 %v111
    %v266 = vunpack.c.h.b16 %v111
    %v267 = vunpack.c.l.b16 %v112
    %v268 = vunpack.c.h.b16 %v112
    %v269 = vunpack.c.l.b16 %v113
    %v270 = vunpack.c.h.b16 %v113
    %v271 = vunpack.c.l.b16 %v114
    %v272 = vunpack.c.h.b16 %v114
    %v273 = vunpack.c.l.b16 %v115
    %v274 = vunpack.c.h.b16 %v115
    %v275 = vunpack.c.l.b16 %v116
    %v276 = vunpack.c.h.b16 %v116
    %v277 = vunpack.c.l.b16 %v117
    %v278 = vunpack.c.h.b16 %v117
    %v279 = vunpack.c.l.b16 %v118
    %v280 = vunpack.c.h.b16 %v118
    %v281 = vunpack.c.l.b16 %v119
    %v282 = vunpack.c.h.b16 %v119
    %v283 = vunpack.c.l.b16 %v120
    %v284 = vunpack.c.h.b16 %v120
    %v285 = vunpack.c.l.b16 %v121
    %v286 = vunpack.c.h.b16 %v121
    %v287 = vunpack.c.l.b16 %v122
    %v288 = vunpack.c.h.b16 %v122
    %v289 = vpack.c.b16 %v229, %v225
    %v290 = vpack.c.b16 %v230, %v226
    %v291 = vpack.c.b16 %v231, %v227
    %v292 = vpack.c.b16 %v232, %v228
    %v293 = vpack.c.b16 %v237, %v233
    %v294 = vpack.c.b16 %v238, %v234
    %v295 = vpack.c.b16 %v239, %v235
    %v296 = vpack.c.b16 %v240, %v236
    %v297 = vpack.c.b16 %v245, %v241
    %v298 = vpack.c.b16 %v246, %v242
    %v299 = vpack.c.b16 %v247, %v243
    %v300 = vpack.c.b16 %v248, %v244
    %v301 = vpack.c.b16 %v253, %v249
    %v302 = vpack.c.b16 %v254, %v250
    %v303 = vpack.c.b16 %v255, %v251
    %v304 = vpack.c.b16 %v256, %v252
    %v305 = vpack.c.b16 %v261, %v257
    %v306 = vpack.c.b16 %v262, %v258
    %v307 = vpack.c.b16 %v263, %v259
    %v308 = vpack.c.b16 %v264, %v260
    %v309 = vpack.c.b16 %v269, %v265
    %v310 = vpack.c.b16 %v270, %v266
    %v311 = vpack.c.b16 %v271, %v267
    %v312 = vpack.c.b16 %v272, %v268
    %v313 = vpack.c.b16 %v277, %v273
    %v314 = vpack.c.b16 %v278, %v274
    %v315 = vpack.c.b16 %v279, %v275
    %v316 = vpack.c.b16 %v280, %v276
    %v317 = vpack.c.b16 %v285, %v281
    %v318 = vpack.c.b16 %v286, %v282
    %v319 = vpack.c.b16 %v287, %v283
    %v320 = vpack.c.b16 %v288, %v284
    %353 = vmatprep.subr.bf16.mxu0 %v318
    %354 = vmatpush1.bf16.msra.mxu0 %v317
    %355 = vmatprep.subr.bf16.mxu0 %v314
    %356 = vmatpush1.bf16.msra.mxu0 %v313
    %357 = vmatprep.subr.bf16.mxu0 %v310
    %358 = vmatpush1.bf16.msra.mxu0 %v309
    %359 = vmatprep.subr.bf16.mxu0 %v306
    %360 = vmatpush1.bf16.msra.mxu0 %v305
    %361 = vmatprep.subr.bf16.mxu0 %v302
    %362 = vmatpush1.bf16.msra.mxu0 %v301
    %363 = vmatprep.subr.bf16.mxu0 %v298
    %364 = vmatpush1.bf16.msra.mxu0 %v297
    %365 = vmatprep.subr.bf16.mxu0 %v294
    %366 = vmatpush1.bf16.msra.mxu0 %v293
    %367 = vmatprep.subr.bf16.mxu0 %v290
    %368 = vmatpush1.bf16.msra.mxu0 %v289
    %369 = vmatprep.subr.bf16.mxu0 0
    %370 = vmatpush2.bf16.msra.mxu0 0
    %371 = vmatprep.subr.bf16.mxu0 0
    %372 = vmatpush2.bf16.msra.mxu0 0
    %373 = vmatprep.subr.bf16.mxu0 0
    %374 = vmatpush2.bf16.msra.mxu0 0
    %375 = vmatprep.subr.bf16.mxu0 0
    %376 = vmatpush2.bf16.msra.mxu0 0
    %377 = vmatprep.subr.bf16.mxu0 0
    %378 = vmatpush2.bf16.msra.mxu0 0
    %379 = vmatprep.subr.bf16.mxu0 0
    %380 = vmatpush2.bf16.msra.mxu0 0
    %381 = vmatprep.subr.bf16.mxu0 0
    %382 = vmatpush2.bf16.msra.mxu0 0
    %383 = vmatprep.subr.bf16.mxu0 0
    %384 = vmatpush2.bf16.msra.mxu0 0
    %385 = vmatprep.mubr.bf16.mxu0 0
    %386 = vmatmul.mubr.bf16.gmra.mxu0 %v177
    %v387 = vpop.f32.mrf.mxu0
    %v388 = vadd.f32 %v128, %v387
    %v389 = vpop.f32.mrf.mxu0
    %v390 = vadd.f32 %v132, %v389
    %v391 = vpop.f32.mrf.mxu0
    %v392 = vadd.f32 %v128, %v391
    %v393 = vpop.f32.mrf.mxu0
    %v394 = vadd.f32 %v132, %v393
    %395 = vmatprep.mubr.bf16.mxu0 0
    %396 = vmatmul.mubr.bf16.gmra.mxu0 %v178
    %v397 = vpop.f32.mrf.mxu0
    %v398 = vadd.f32 %v128, %v397
    %v399 = vpop.f32.mrf.mxu0
    %v400 = vadd.f32 %v132, %v399
    %v401 = vpop.f32.mrf.mxu0
    %v402 = vadd.f32 %v128, %v401
    %v403 = vpop.f32.mrf.mxu0
    %v404 = vadd.f32 %v132, %v403
    %405 = vmatprep.mubr.bf16.mxu0 0
    %406 = vmatmul.mubr.bf16.gmra.mxu0 %v179
    %v407 = vpop.f32.mrf.mxu0
    %v408 = vadd.f32 %v128, %v407
    %v409 = vpop.f32.mrf.mxu0
    %v410 = vadd.f32 %v132, %v409
    %v411 = vpop.f32.mrf.mxu0
    %v412 = vadd.f32 %v128, %v411
    %v413 = vpop.f32.mrf.mxu0
    %v414 = vadd.f32 %v132, %v413
    %415 = vmatprep.mubr.bf16.mxu0 0
    %416 = vmatmul.mubr.bf16.gmra.mxu0 %v180
    %v417 = vpop.f32.mrf.mxu0
    %v418 = vadd.f32 %v128, %v417
    %v419 = vpop.f32.mrf.mxu0
    %v420 = vadd.f32 %v132, %v419
    %v421 = vpop.f32.mrf.mxu0
    %v422 = vadd.f32 %v128, %v421
    %v423 = vpop.f32.mrf.mxu0
    %v424 = vadd.f32 %v132, %v423
    %425 = vmatprep.mubr.bf16.mxu0 0
    %426 = vmatmul.mubr.bf16.gmra.mxu0 %v181
    %v427 = vpop.f32.mrf.mxu0
    %v428 = vadd.f32 %v128, %v427
    %v429 = vpop.f32.mrf.mxu0
    %v430 = vadd.f32 %v132, %v429
    %v431 = vpop.f32.mrf.mxu0
    %v432 = vadd.f32 %v128, %v431
    %v433 = vpop.f32.mrf.mxu0
    %v434 = vadd.f32 %v132, %v433
    %435 = vmatprep.mubr.bf16.mxu0 0
    %436 = vmatmul.mubr.bf16.gmra.mxu0 %v182
    %v437 = vpop.f32.mrf.mxu0
    %v438 = vadd.f32 %v128, %v437
    %v439 = vpop.f32.mrf.mxu0
    %v440 = vadd.f32 %v132, %v439
    %v441 = vpop.f32.mrf.mxu0
    %v442 = vadd.f32 %v128, %v441
    %v443 = vpop.f32.mrf.mxu0
    %v444 = vadd.f32 %v132, %v443
    %445 = vmatprep.mubr.bf16.mxu0 0
    %446 = vmatmul.mubr.bf16.gmra.mxu0 %v183
    %v447 = vpop.f32.mrf.mxu0
    %v448 = vadd.f32 %v128, %v447
    %v449 = vpop.f32.mrf.mxu0
    %v450 = vadd.f32 %v132, %v449
    %v451 = vpop.f32.mrf.mxu0
    %v452 = vadd.f32 %v128, %v451
    %v453 = vpop.f32.mrf.mxu0
    %v454 = vadd.f32 %v132, %v453
    %455 = vmatprep.mubr.bf16.mxu0 0
    %456 = vmatmul.mubr.bf16.gmra.mxu0 %v184
    %v457 = vpop.f32.mrf.mxu0
    %v458 = vadd.f32 %v128, %v457
    %v459 = vpop.f32.mrf.mxu0
    %v460 = vadd.f32 %v132, %v459
    %v461 = vpop.f32.mrf.mxu0
    %v462 = vadd.f32 %v128, %v461
    %v463 = vpop.f32.mrf.mxu0
    %v464 = vadd.f32 %v132, %v463
    %465 = vdwg.mxu0
    %466 = vmatprep.subr.bf16.mxu0 %v320
    %467 = vmatpush1.bf16.msra.mxu0 %v319
    %468 = vmatprep.subr.bf16.mxu0 %v316
    %469 = vmatpush1.bf16.msra.mxu0 %v315
    %470 = vmatprep.subr.bf16.mxu0 %v312
    %471 = vmatpush1.bf16.msra.mxu0 %v311
    %472 = vmatprep.subr.bf16.mxu0 %v308
    %473 = vmatpush1.bf16.msra.mxu0 %v307
    %474 = vmatprep.subr.bf16.mxu0 %v304
    %475 = vmatpush1.bf16.msra.mxu0 %v303
    %476 = vmatprep.subr.bf16.mxu0 %v300
    %477 = vmatpush1.bf16.msra.mxu0 %v299
    %478 = vmatprep.subr.bf16.mxu0 %v296
    %479 = vmatpush1.bf16.msra.mxu0 %v295
    %480 = vmatprep.subr.bf16.mxu0 %v292
    %481 = vmatpush1.bf16.msra.mxu0 %v291
    %482 = vmatprep.subr.bf16.mxu0 0
    %483 = vmatpush2.bf16.msra.mxu0 0
    %484 = vmatprep.subr.bf16.mxu0 0
    %485 = vmatpush2.bf16.msra.mxu0 0
    %486 = vmatprep.subr.bf16.mxu0 0
    %487 = vmatpush2.bf16.msra.mxu0 0
    %488 = vmatprep.subr.bf16.mxu0 0
    %489 = vmatpush2.bf16.msra.mxu0 0
    %490 = vmatprep.subr.bf16.mxu0 0
    %491 = vmatpush2.bf16.msra.mxu0 0
    %492 = vmatprep.subr.bf16.mxu0 0
    %493 = vmatpush2.bf16.msra.mxu0 0
    %494 = vmatprep.subr.bf16.mxu0 0
    %495 = vmatpush2.bf16.msra.mxu0 0
    %496 = vmatprep.subr.bf16.mxu0 0
    %497 = vmatpush2.bf16.msra.mxu0 0
    %498 = vmatprep.mubr.bf16.mxu0 0
    %499 = vmatmul.mubr.bf16.gmra.mxu0 %v177
    %v500 = vpop.f32.mrf.mxu0
    %v501 = vadd.f32 %v136, %v500
    %v502 = vpop.f32.mrf.mxu0
    %v503 = vadd.f32 %v140, %v502
    %v504 = vpop.f32.mrf.mxu0
    %v505 = vadd.f32 %v136, %v504
    %v506 = vpop.f32.mrf.mxu0
    %v507 = vadd.f32 %v140, %v506
    %508 = vmatprep.mubr.bf16.mxu0 0
    %509 = vmatmul.mubr.bf16.gmra.mxu0 %v178
    %v510 = vpop.f32.mrf.mxu0
    %v511 = vadd.f32 %v136, %v510
    %v512 = vpop.f32.mrf.mxu0
    %v513 = vadd.f32 %v140, %v512
    %v514 = vpop.f32.mrf.mxu0
    %v515 = vadd.f32 %v136, %v514
    %v516 = vpop.f32.mrf.mxu0
    %v517 = vadd.f32 %v140, %v516
    %518 = vmatprep.mubr.bf16.mxu0 0
    %519 = vmatmul.mubr.bf16.gmra.mxu0 %v179
    %v520 = vpop.f32.mrf.mxu0
    %v521 = vadd.f32 %v136, %v520
    %v522 = vpop.f32.mrf.mxu0
    %v523 = vadd.f32 %v140, %v522
    %v524 = vpop.f32.mrf.mxu0
    %v525 = vadd.f32 %v136, %v524
    %v526 = vpop.f32.mrf.mxu0
    %v527 = vadd.f32 %v140, %v526
    %528 = vmatprep.mubr.bf16.mxu0 0
    %529 = vmatmul.mubr.bf16.gmra.mxu0 %v180
    %v530 = vpop.f32.mrf.mxu0
    %v531 = vadd.f32 %v136, %v530
    %v532 = vpop.f32.mrf.mxu0
    %v533 = vadd.f32 %v140, %v532
    %v534 = vpop.f32.mrf.mxu0
    %v535 = vadd.f32 %v136, %v534
    %v536 = vpop.f32.mrf.mxu0
    %v537 = vadd.f32 %v140, %v536
    %538 = vmatprep.mubr.bf16.mxu0 0
    %539 = vmatmul.mubr.bf16.gmra.mxu0 %v181
    %v540 = vpop.f32.mrf.mxu0
    %v541 = vadd.f32 %v136, %v540
    %v542 = vpop.f32.mrf.mxu0
    %v543 = vadd.f32 %v140, %v542
    %v544 = vpop.f32.mrf.mxu0
    %v545 = vadd.f32 %v136, %v544
    %v546 = vpop.f32.mrf.mxu0
    %v547 = vadd.f32 %v140, %v546
    %548 = vmatprep.mubr.bf16.mxu0 0
    %549 = vmatmul.mubr.bf16.gmra.mxu0 %v182
    %v550 = vpop.f32.mrf.mxu0
    %v551 = vadd.f32 %v136, %v550
    %v552 = vpop.f32.mrf.mxu0
    %v553 = vadd.f32 %v140, %v552
    %v554 = vpop.f32.mrf.mxu0
    %v555 = vadd.f32 %v136, %v554
    %v556 = vpop.f32.mrf.mxu0
    %v557 = vadd.f32 %v140, %v556
    %558 = vmatprep.mubr.bf16.mxu0 0
    %559 = vmatmul.mubr.bf16.gmra.mxu0 %v183
    %v560 = vpop.f32.mrf.mxu0
    %v561 = vadd.f32 %v136, %v560
    %v562 = vpop.f32.mrf.mxu0
    %v563 = vadd.f32 %v140, %v562
    %v564 = vpop.f32.mrf.mxu0
    %v565 = vadd.f32 %v136, %v564
    %v566 = vpop.f32.mrf.mxu0
    %v567 = vadd.f32 %v140, %v566
    %568 = vmatprep.mubr.bf16.mxu0 0
    %569 = vmatmul.mubr.bf16.gmra.mxu0 %v184
    %v570 = vpop.f32.mrf.mxu0
    %v571 = vadd.f32 %v136, %v570
    %v572 = vpop.f32.mrf.mxu0
    %v573 = vadd.f32 %v140, %v572
    %v574 = vpop.f32.mrf.mxu0
    %v575 = vadd.f32 %v136, %v574
    %v576 = vpop.f32.mrf.mxu0
    %v577 = vadd.f32 %v140, %v576
    %578 = vdwg.mxu0
    %v579 = vmax.f32 %v388, 0.0
    %v580 = vmax.f32 %v390, 0.0
    %v581 = vmax.f32 %v501, 0.0
    %v582 = vmax.f32 %v503, 0.0
    %v583 = vmax.f32 %v392, 0.0
    %v584 = vmax.f32 %v394, 0.0
    %v585 = vmax.f32 %v505, 0.0
    %v586 = vmax.f32 %v507, 0.0
    %v587 = vmax.f32 %v398, 0.0
    %v588 = vmax.f32 %v400, 0.0
    %v589 = vmax.f32 %v511, 0.0
    %v590 = vmax.f32 %v513, 0.0
    %v591 = vmax.f32 %v402, 0.0
    %v592 = vmax.f32 %v404, 0.0
    %v593 = vmax.f32 %v515, 0.0
    %v594 = vmax.f32 %v517, 0.0
    %v595 = vmax.f32 %v408, 0.0
    %v596 = vmax.f32 %v410, 0.0
    %v597 = vmax.f32 %v521, 0.0
    %v598 = vmax.f32 %v523, 0.0
    %v599 = vmax.f32 %v412, 0.0
    %v600 = vmax.f32 %v414, 0.0
    %v601 = vmax.f32 %v525, 0.0
    %v602 = vmax.f32 %v527, 0.0
    %v603 = vmax.f32 %v418, 0.0
    %v604 = vmax.f32 %v420, 0.0
    %v605 = vmax.f32 %v531, 0.0
    %v606 = vmax.f32 %v533, 0.0
    %v607 = vmax.f32 %v422, 0.0
    %v608 = vmax.f32 %v424, 0.0
    %v609 = vmax.f32 %v535, 0.0
    %v610 = vmax.f32 %v537, 0.0
    %v611 = vmax.f32 %v428, 0.0
    %v612 = vmax.f32 %v430, 0.0
    %v613 = vmax.f32 %v541, 0.0
    %v614 = vmax.f32 %v543, 0.0
    %v615 = vmax.f32 %v432, 0.0
    %v616 = vmax.f32 %v434, 0.0
    %v617 = vmax.f32 %v545, 0.0
    %v618 = vmax.f32 %v547, 0.0
    %v619 = vmax.f32 %v438, 0.0
    %v620 = vmax.f32 %v440, 0.0
    %v621 = vmax.f32 %v551, 0.0
    %v622 = vmax.f32 %v553, 0.0
    %v623 = vmax.f32 %v442, 0.0
    %v624 = vmax.f32 %v444, 0.0
    %v625 = vmax.f32 %v555, 0.0
    %v626 = vmax.f32 %v557, 0.0
    %v627 = vmax.f32 %v448, 0.0
    %v628 = vmax.f32 %v450, 0.0
    %v629 = vmax.f32 %v561, 0.0
    %v630 = vmax.f32 %v563, 0.0
    %v631 = vmax.f32 %v452, 0.0
    %v632 = vmax.f32 %v454, 0.0
    %v633 = vmax.f32 %v565, 0.0
    %v634 = vmax.f32 %v567, 0.0
    %v635 = vmax.f32 %v458, 0.0
    %v636 = vmax.f32 %v460, 0.0
    %v637 = vmax.f32 %v571, 0.0
    %v638 = vmax.f32 %v573, 0.0
    %v639 = vmax.f32 %v462, 0.0
    %v640 = vmax.f32 %v464, 0.0
    %v641 = vmax.f32 %v575, 0.0
    %v642 = vmax.f32 %v577, 0.0
    %v643 = vpack.c.bf16 %v583, %v579
    %v644 = vpack.c.bf16 %v584, %v580
    %v645 = vpack.c.bf16 %v585, %v581
    %v646 = vpack.c.bf16 %v586, %v582
    %v647 = vpack.c.bf16 %v591, %v587
    %v648 = vpack.c.bf16 %v592, %v588
    %v649 = vpack.c.bf16 %v593, %v589
    %v650 = vpack.c.bf16 %v594, %v590
    %v651 = vpack.c.bf16 %v599, %v595
    %v652 = vpack.c.bf16 %v600, %v596
    %v653 = vpack.c.bf16 %v601, %v597
    %v654 = vpack.c.bf16 %v602, %v598
    %v655 = vpack.c.bf16 %v607, %v603
    %v656 = vpack.c.bf16 %v608, %v604
    %v657 = vpack.c.bf16 %v609, %v605
    %v658 = vpack.c.bf16 %v610, %v606
    %v659 = vpack.c.bf16 %v615, %v611
    %v660 = vpack.c.bf16 %v616, %v612
    %v661 = vpack.c.bf16 %v617, %v613
    %v662 = vpack.c.bf16 %v618, %v614
    %v663 = vpack.c.bf16 %v623, %v619
    %v664 = vpack.c.bf16 %v624, %v620
    %v665 = vpack.c.bf16 %v625, %v621
    %v666 = vpack.c.bf16 %v626, %v622
    %v667 = vpack.c.bf16 %v631, %v627
    %v668 = vpack.c.bf16 %v632, %v628
    %v669 = vpack.c.bf16 %v633, %v629
    %v670 = vpack.c.bf16 %v634, %v630
    %v671 = vpack.c.bf16 %v639, %v635
    %v672 = vpack.c.bf16 %v640, %v636
    %v673 = vpack.c.bf16 %v641, %v637
    %v674 = vpack.c.bf16 %v642, %v638
    %v675 = vld [vmem:[#allocation8] sm:$0xf]
    %v676 = vld [vmem:[#allocation8 + $0x4] sm:$0xf]
    %v677 = vld [vmem:[#allocation8 + $0x8] sm:$0xf]
    %v678 = vld [vmem:[#allocation8 + $0xc] sm:$0xf]
    %v679 = vld [vmem:[#allocation8 + $0x10] sm:$0xf]
    %v680 = vld [vmem:[#allocation8 + $0x14] sm:$0xf]
    %v681 = vld [vmem:[#allocation8 + $0x18] sm:$0xf]
    %v682 = vld [vmem:[#allocation8 + $0x1c] sm:$0xf]
    %v683 = vld [vmem:[#allocation8 + $0x20] sm:$0xf]
    %v684 = vld [vmem:[#allocation8 + $0x24] sm:$0xf]
    %v685 = vld [vmem:[#allocation8 + $0x28] sm:$0xf]
    %v686 = vld [vmem:[#allocation8 + $0x2c] sm:$0xf]
    %v687 = vld [vmem:[#allocation8 + $0x30] sm:$0xf]
    %v688 = vld [vmem:[#allocation8 + $0x34] sm:$0xf]
    %v689 = vld [vmem:[#allocation8 + $0x38] sm:$0xf]
    %v690 = vld [vmem:[#allocation8 + $0x3c] sm:$0xf]
    %v691 = vld [vmem:[#allocation8 + $0x40] sm:$0xf]
    %v692 = vld [vmem:[#allocation8 + $0x44] sm:$0xf]
    %v693 = vld [vmem:[#allocation8 + $0x48] sm:$0xf]
    %v694 = vld [vmem:[#allocation8 + $0x4c] sm:$0xf]
    %v695 = vld [vmem:[#allocation8 + $0x50] sm:$0xf]
    %v696 = vld [vmem:[#allocation8 + $0x54] sm:$0xf]
    %v697 = vld [vmem:[#allocation8 + $0x58] sm:$0xf]
    %v698 = vld [vmem:[#allocation8 + $0x5c] sm:$0xf]
    %v699 = vld [vmem:[#allocation8 + $0x60] sm:$0xf]
    %v700 = vld [vmem:[#allocation8 + $0x64] sm:$0xf]
    %v701 = vld [vmem:[#allocation8 + $0x68] sm:$0xf]
    %v702 = vld [vmem:[#allocation8 + $0x6c] sm:$0xf]
    %v703 = vld [vmem:[#allocation8 + $0x70] sm:$0xf]
    %v704 = vld [vmem:[#allocation8 + $0x74] sm:$0xf]
    %v705 = vld [vmem:[#allocation8 + $0x78] sm:$0xf]
    %v706 = vld [vmem:[#allocation8 + $0x7c] sm:$0xf]
    %v707 = vld [vmem:[#allocation8 + $0x80] sm:$0xf]
    %v708 = vld [vmem:[#allocation8 + $0x84] sm:$0xf]
    %v709 = vld [vmem:[#allocation8 + $0x88] sm:$0xf]
    %v710 = vld [vmem:[#allocation8 + $0x8c] sm:$0xf]
    %v711 = vld [vmem:[#allocation8 + $0x90] sm:$0xf]
    %v712 = vld [vmem:[#allocation8 + $0x94] sm:$0xf]
    %v713 = vld [vmem:[#allocation8 + $0x98] sm:$0xf]
    %v714 = vld [vmem:[#allocation8 + $0x9c] sm:$0xf]
    %v715 = vld [vmem:[#allocation8 + $0xa0] sm:$0xf]
    %v716 = vld [vmem:[#allocation8 + $0xa4] sm:$0xf]
    %v717 = vld [vmem:[#allocation8 + $0xa8] sm:$0xf]
    %v718 = vld [vmem:[#allocation8 + $0xac] sm:$0xf]
    %v719 = vld [vmem:[#allocation8 + $0xb0] sm:$0xf]
    %v720 = vld [vmem:[#allocation8 + $0xb4] sm:$0xf]
    %v721 = vld [vmem:[#allocation8 + $0xb8] sm:$0xf]
    %v722 = vld [vmem:[#allocation8 + $0xbc] sm:$0xf]
    %v723 = vld [vmem:[#allocation8 + $0xc0] sm:$0xf]
    %v724 = vld [vmem:[#allocation8 + $0xc4] sm:$0xf]
    %v725 = vld [vmem:[#allocation8 + $0xc8] sm:$0xf]
    %v726 = vld [vmem:[#allocation8 + $0xcc] sm:$0xf]
    %v727 = vld [vmem:[#allocation8 + $0xd0] sm:$0xf]
    %v728 = vld [vmem:[#allocation8 + $0xd4] sm:$0xf]
    %v729 = vld [vmem:[#allocation8 + $0xd8] sm:$0xf]
    %v730 = vld [vmem:[#allocation8 + $0xdc] sm:$0xf]
    %v731 = vld [vmem:[#allocation8 + $0xe0] sm:$0xf]
    %v732 = vld [vmem:[#allocation8 + $0xe4] sm:$0xf]
    %v733 = vld [vmem:[#allocation8 + $0xe8] sm:$0xf]
    %v734 = vld [vmem:[#allocation8 + $0xec] sm:$0xf]
    %v735 = vld [vmem:[#allocation8 + $0xf0] sm:$0xf]
    %v736 = vld [vmem:[#allocation8 + $0xf4] sm:$0xf]
    %v737 = vld [vmem:[#allocation8 + $0xf8] sm:$0xf]
    %v738 = vld [vmem:[#allocation8 + $0xfc] sm:$0xf]
    %v739 = vld [vmem:[%s4] sm:$0x1]
    %v741 = vlaneseq
    %v742 = vshrl.u32 %v741, 7
    %v743 = vsub.s32 0, %v742
    %v744 = vrot.slane %v739, %v743
    %v810 = vunpack.c.l.b16 %v675
    %v811 = vunpack.c.l.b16 %v676
    %v812 = vunpack.c.l.b16 %v677
    %v813 = vunpack.c.l.b16 %v678
    %v814 = vunpack.c.l.b16 %v679
    %v815 = vunpack.c.l.b16 %v680
    %v816 = vunpack.c.l.b16 %v681
    %v817 = vunpack.c.l.b16 %v682
    %v818 = vunpack.c.l.b16 %v683
    %v819 = vunpack.c.l.b16 %v684
    %v820 = vunpack.c.l.b16 %v685
    %v821 = vunpack.c.l.b16 %v686
    %v822 = vunpack.c.l.b16 %v687
    %v823 = vunpack.c.l.b16 %v688
    %v824 = vunpack.c.l.b16 %v689
    %v825 = vunpack.c.l.b16 %v690
    %v826 = vunpack.c.l.b16 %v691
    %v827 = vunpack.c.l.b16 %v692
    %v828 = vunpack.c.l.b16 %v693
    %v829 = vunpack.c.l.b16 %v694
    %v830 = vunpack.c.l.b16 %v695
    %v831 = vunpack.c.l.b16 %v696
    %v832 = vunpack.c.l.b16 %v697
    %v833 = vunpack.c.l.b16 %v698
    %v834 = vunpack.c.l.b16 %v699
    %v835 = vunpack.c.l.b16 %v700
    %v836 = vunpack.c.l.b16 %v701
    %v837 = vunpack.c.l.b16 %v702
    %v838 = vunpack.c.l.b16 %v703
    %v839 = vunpack.c.l.b16 %v704
    %v840 = vunpack.c.l.b16 %v705
    %v841 = vunpack.c.l.b16 %v706
    %v842 = vunpack.c.l.b16 %v707
    %v843 = vunpack.c.l.b16 %v708
    %v844 = vunpack.c.l.b16 %v709
    %v845 = vunpack.c.l.b16 %v710
    %v846 = vunpack.c.l.b16 %v711
    %v847 = vunpack.c.l.b16 %v712
    %v848 = vunpack.c.l.b16 %v713
    %v849 = vunpack.c.l.b16 %v714
    %v850 = vunpack.c.l.b16 %v715
    %v851 = vunpack.c.l.b16 %v716
    %v852 = vunpack.c.l.b16 %v717
    %v853 = vunpack.c.l.b16 %v718
    %v854 = vunpack.c.l.b16 %v719
    %v855 = vunpack.c.l.b16 %v720
    %v856 = vunpack.c.l.b16 %v721
    %v857 = vunpack.c.l.b16 %v722
    %v858 = vunpack.c.l.b16 %v723
    %v859 = vunpack.c.l.b16 %v724
    %v860 = vunpack.c.l.b16 %v725
    %v861 = vunpack.c.l.b16 %v726
    %v862 = vunpack.c.l.b16 %v727
    %v863 = vunpack.c.l.b16 %v728
    %v864 = vunpack.c.l.b16 %v729
    %v865 = vunpack.c.l.b16 %v730
    %v866 = vunpack.c.l.b16 %v731
    %v867 = vunpack.c.l.b16 %v732
    %v868 = vunpack.c.l.b16 %v733
    %v869 = vunpack.c.l.b16 %v734
    %v870 = vunpack.c.l.b16 %v735
    %v871 = vunpack.c.l.b16 %v736
    %v872 = vunpack.c.l.b16 %v737
    %v873 = vunpack.c.l.b16 %v738
    %v874 = vpack.c.b16 %v811, %v810
    %v875 = vpack.c.b16 %v813, %v812
    %v876 = vpack.c.b16 %v815, %v814
    %v877 = vpack.c.b16 %v817, %v816
    %v878 = vpack.c.b16 %v819, %v818
    %v879 = vpack.c.b16 %v821, %v820
    %v880 = vpack.c.b16 %v823, %v822
    %v881 = vpack.c.b16 %v825, %v824
    %v882 = vpack.c.b16 %v827, %v826
    %v883 = vpack.c.b16 %v829, %v828
    %v884 = vpack.c.b16 %v831, %v830
    %v885 = vpack.c.b16 %v833, %v832
    %v886 = vpack.c.b16 %v835, %v834
    %v887 = vpack.c.b16 %v837, %v836
    %v888 = vpack.c.b16 %v839, %v838
    %v889 = vpack.c.b16 %v841, %v840
    %v890 = vpack.c.b16 %v843, %v842
    %v891 = vpack.c.b16 %v845, %v844
    %v892 = vpack.c.b16 %v847, %v846
    %v893 = vpack.c.b16 %v849, %v848
    %v894 = vpack.c.b16 %v851, %v850
    %v895 = vpack.c.b16 %v853, %v852
    %v896 = vpack.c.b16 %v855, %v854
    %v897 = vpack.c.b16 %v857, %v856
    %v898 = vpack.c.b16 %v859, %v858
    %v899 = vpack.c.b16 %v861, %v860
    %v900 = vpack.c.b16 %v863, %v862
    %v901 = vpack.c.b16 %v865, %v864
    %v902 = vpack.c.b16 %v867, %v866
    %v903 = vpack.c.b16 %v869, %v868
    %v904 = vpack.c.b16 %v871, %v870
    %v905 = vpack.c.b16 %v873, %v872
    %938 = vmatprep.subr.bf16.mxu0 0
    %939 = vmatpush1.bf16.msra.mxu0 %v881
    %940 = vmatprep.subr.bf16.mxu0 0
    %941 = vmatpush1.bf16.msra.mxu0 %v880
    %942 = vmatprep.subr.bf16.mxu0 0
    %943 = vmatpush1.bf16.msra.mxu0 %v879
    %944 = vmatprep.subr.bf16.mxu0 0
    %945 = vmatpush1.bf16.msra.mxu0 %v878
    %946 = vmatprep.subr.bf16.mxu0 0
    %947 = vmatpush1.bf16.msra.mxu0 %v877
    %948 = vmatprep.subr.bf16.mxu0 0
    %949 = vmatpush1.bf16.msra.mxu0 %v876
    %950 = vmatprep.subr.bf16.mxu0 0
    %951 = vmatpush1.bf16.msra.mxu0 %v875
    %952 = vmatprep.subr.bf16.mxu0 0
    %953 = vmatpush1.bf16.msra.mxu0 %v874
    %954 = vmatprep.subr.bf16.mxu0 0
    %955 = vmatpush2.bf16.msra.mxu0 %v889
    %956 = vmatprep.subr.bf16.mxu0 0
    %957 = vmatpush2.bf16.msra.mxu0 %v888
    %958 = vmatprep.subr.bf16.mxu0 0
    %959 = vmatpush2.bf16.msra.mxu0 %v887
    %960 = vmatprep.subr.bf16.mxu0 0
    %961 = vmatpush2.bf16.msra.mxu0 %v886
    %962 = vmatprep.subr.bf16.mxu0 0
    %963 = vmatpush2.bf16.msra.mxu0 %v885
    %964 = vmatprep.subr.bf16.mxu0 0
    %965 = vmatpush2.bf16.msra.mxu0 %v884
    %966 = vmatprep.subr.bf16.mxu0 0
    %967 = vmatpush2.bf16.msra.mxu0 %v883
    %968 = vmatprep.subr.bf16.mxu0 0
    %969 = vmatpush2.bf16.msra.mxu0 %v882
    %970 = vmatprep.mubr.bf16.mxu0 %v644
    %971 = vmatmul.mubr.bf16.gmra.mxu0 %v643
    %v972 = vpop.f32.mrf.mxu0
    %v973 = vadd.f32 %v744, %v972
    %v974 = vpop.f32.mrf.mxu0
    %v975 = vpop.f32.mrf.mxu0
    %v976 = vadd.f32 %v744, %v975
    %v977 = vpop.f32.mrf.mxu0
    %978 = vmatprep.mubr.bf16.mxu0 %v648
    %979 = vmatmul.mubr.bf16.gmra.mxu0 %v647
    %v980 = vpop.f32.mrf.mxu0
    %v981 = vadd.f32 %v744, %v980
    %v982 = vpop.f32.mrf.mxu0
    %v983 = vpop.f32.mrf.mxu0
    %v984 = vadd.f32 %v744, %v983
    %v985 = vpop.f32.mrf.mxu0
    %986 = vmatprep.mubr.bf16.mxu0 %v652
    %987 = vmatmul.mubr.bf16.gmra.mxu0 %v651
    %v988 = vpop.f32.mrf.mxu0
    %v989 = vadd.f32 %v744, %v988
    %v990 = vpop.f32.mrf.mxu0
    %v991 = vpop.f32.mrf.mxu0
    %v992 = vadd.f32 %v744, %v991
    %v993 = vpop.f32.mrf.mxu0
    %994 = vmatprep.mubr.bf16.mxu0 %v656
    %995 = vmatmul.mubr.bf16.gmra.mxu0 %v655
    %v996 = vpop.f32.mrf.mxu0
    %v997 = vadd.f32 %v744, %v996
    %v998 = vpop.f32.mrf.mxu0
    %v999 = vpop.f32.mrf.mxu0
    %v1000 = vadd.f32 %v744, %v999
    %v1001 = vpop.f32.mrf.mxu0
    %1002 = vmatprep.mubr.bf16.mxu0 %v660
    %1003 = vmatmul.mubr.bf16.gmra.mxu0 %v659
    %v1004 = vpop.f32.mrf.mxu0
    %v1005 = vadd.f32 %v744, %v1004
    %v1006 = vpop.f32.mrf.mxu0
    %v1007 = vpop.f32.mrf.mxu0
    %v1008 = vadd.f32 %v744, %v1007
    %v1009 = vpop.f32.mrf.mxu0
    %1010 = vmatprep.mubr.bf16.mxu0 %v664
    %1011 = vmatmul.mubr.bf16.gmra.mxu0 %v663
    %v1012 = vpop.f32.mrf.mxu0
    %v1013 = vadd.f32 %v744, %v1012
    %v1014 = vpop.f32.mrf.mxu0
    %v1015 = vpop.f32.mrf.mxu0
    %v1016 = vadd.f32 %v744, %v1015
    %v1017 = vpop.f32.mrf.mxu0
    %1018 = vmatprep.mubr.bf16.mxu0 %v668
    %1019 = vmatmul.mubr.bf16.gmra.mxu0 %v667
    %v1020 = vpop.f32.mrf.mxu0
    %v1021 = vadd.f32 %v744, %v1020
    %v1022 = vpop.f32.mrf.mxu0
    %v1023 = vpop.f32.mrf.mxu0
    %v1024 = vadd.f32 %v744, %v1023
    %v1025 = vpop.f32.mrf.mxu0
    %1026 = vmatprep.mubr.bf16.mxu0 %v672
    %1027 = vmatmul.mubr.bf16.gmra.mxu0 %v671
    %v1028 = vpop.f32.mrf.mxu0
    %v1029 = vadd.f32 %v744, %v1028
    %v1030 = vpop.f32.mrf.mxu0
    %v1031 = vpop.f32.mrf.mxu0
    %v1032 = vadd.f32 %v744, %v1031
    %v1033 = vpop.f32.mrf.mxu0
    %1034 = vdwg.mxu0
    %1035 = vmatprep.subr.bf16.mxu0 0
    %1036 = vmatpush1.bf16.msra.mxu0 %v897
    %1037 = vmatprep.subr.bf16.mxu0 0
    %1038 = vmatpush1.bf16.msra.mxu0 %v896
    %1039 = vmatprep.subr.bf16.mxu0 0
    %1040 = vmatpush1.bf16.msra.mxu0 %v895
    %1041 = vmatprep.subr.bf16.mxu0 0
    %1042 = vmatpush1.bf16.msra.mxu0 %v894
    %1043 = vmatprep.subr.bf16.mxu0 0
    %1044 = vmatpush1.bf16.msra.mxu0 %v893
    %1045 = vmatprep.subr.bf16.mxu0 0
    %1046 = vmatpush1.bf16.msra.mxu0 %v892
    %1047 = vmatprep.subr.bf16.mxu0 0
    %1048 = vmatpush1.bf16.msra.mxu0 %v891
    %1049 = vmatprep.subr.bf16.mxu0 0
    %1050 = vmatpush1.bf16.msra.mxu0 %v890
    %1051 = vmatprep.subr.bf16.mxu0 0
    %1052 = vmatpush2.bf16.msra.mxu0 %v905
    %1053 = vmatprep.subr.bf16.mxu0 0
    %1054 = vmatpush2.bf16.msra.mxu0 %v904
    %1055 = vmatprep.subr.bf16.mxu0 0
    %1056 = vmatpush2.bf16.msra.mxu0 %v903
    %1057 = vmatprep.subr.bf16.mxu0 0
    %1058 = vmatpush2.bf16.msra.mxu0 %v902
    %1059 = vmatprep.subr.bf16.mxu0 0
    %1060 = vmatpush2.bf16.msra.mxu0 %v901
    %1061 = vmatprep.subr.bf16.mxu0 0
    %1062 = vmatpush2.bf16.msra.mxu0 %v900
    %1063 = vmatprep.subr.bf16.mxu0 0
    %1064 = vmatpush2.bf16.msra.mxu0 %v899
    %1065 = vmatprep.subr.bf16.mxu0 0
    %1066 = vmatpush2.bf16.msra.mxu0 %v898
    %1067 = vmatprep.mubr.bf16.mxu0 %v646
    %1068 = vmatmul.mubr.bf16.gmra.mxu0 %v645
    %v1069 = vpop.f32.mrf.mxu0
    %v1070 = vadd.f32 %v973, %v1069
    %v1071 = vpop.f32.mrf.mxu0
    %v1072 = vpop.f32.mrf.mxu0
    %v1073 = vadd.f32 %v976, %v1072
    %v1074 = vpop.f32.mrf.mxu0
    %1075 = vmatprep.mubr.bf16.mxu0 %v650
    %1076 = vmatmul.mubr.bf16.gmra.mxu0 %v649
    %v1077 = vpop.f32.mrf.mxu0
    %v1078 = vadd.f32 %v981, %v1077
    %v1079 = vpop.f32.mrf.mxu0
    %v1080 = vpop.f32.mrf.mxu0
    %v1081 = vadd.f32 %v984, %v1080
    %v1082 = vpop.f32.mrf.mxu0
    %1083 = vmatprep.mubr.bf16.mxu0 %v654
    %1084 = vmatmul.mubr.bf16.gmra.mxu0 %v653
    %v1085 = vpop.f32.mrf.mxu0
    %v1086 = vadd.f32 %v989, %v1085
    %v1087 = vpop.f32.mrf.mxu0
    %v1088 = vpop.f32.mrf.mxu0
    %v1089 = vadd.f32 %v992, %v1088
    %v1090 = vpop.f32.mrf.mxu0
    %1091 = vmatprep.mubr.bf16.mxu0 %v658
    %1092 = vmatmul.mubr.bf16.gmra.mxu0 %v657
    %v1093 = vpop.f32.mrf.mxu0
    %v1094 = vadd.f32 %v997, %v1093
    %v1095 = vpop.f32.mrf.mxu0
    %v1096 = vpop.f32.mrf.mxu0
    %v1097 = vadd.f32 %v1000, %v1096
    %v1098 = vpop.f32.mrf.mxu0
    %1099 = vmatprep.mubr.bf16.mxu0 %v662
    %1100 = vmatmul.mubr.bf16.gmra.mxu0 %v661
    %v1101 = vpop.f32.mrf.mxu0
    %v1102 = vadd.f32 %v1005, %v1101
    %v1103 = vpop.f32.mrf.mxu0
    %v1104 = vpop.f32.mrf.mxu0
    %v1105 = vadd.f32 %v1008, %v1104
    %v1106 = vpop.f32.mrf.mxu0
    %1107 = vmatprep.mubr.bf16.mxu0 %v666
    %1108 = vmatmul.mubr.bf16.gmra.mxu0 %v665
    %v1109 = vpop.f32.mrf.mxu0
    %v1110 = vadd.f32 %v1013, %v1109
    %v1111 = vpop.f32.mrf.mxu0
    %v1112 = vpop.f32.mrf.mxu0
    %v1113 = vadd.f32 %v1016, %v1112
    %v1114 = vpop.f32.mrf.mxu0
    %1115 = vmatprep.mubr.bf16.mxu0 %v670
    %1116 = vmatmul.mubr.bf16.gmra.mxu0 %v669
    %v1117 = vpop.f32.mrf.mxu0
    %v1118 = vadd.f32 %v1021, %v1117
    %v1119 = vpop.f32.mrf.mxu0
    %v1120 = vpop.f32.mrf.mxu0
    %v1121 = vadd.f32 %v1024, %v1120
    %v1122 = vpop.f32.mrf.mxu0
    %1123 = vmatprep.mubr.bf16.mxu0 %v674
    %1124 = vmatmul.mubr.bf16.gmra.mxu0 %v673
    %v1125 = vpop.f32.mrf.mxu0
    %v1126 = vadd.f32 %v1029, %v1125
    %v1127 = vpop.f32.mrf.mxu0
    %v1128 = vpop.f32.mrf.mxu0
    %v1129 = vadd.f32 %v1032, %v1128
    %v1130 = vpop.f32.mrf.mxu0
    %1131 = vdwg.mxu0
    %1132 = vst [vmem:[#allocation10] sm:$0xff] %v1070
    %1133 = vst [vmem:[#allocation10 + $0x8] sm:$0xff] %v1073
    %1134 = vst [vmem:[#allocation10 + $0x10] sm:$0xff] %v1078
    %1135 = vst [vmem:[#allocation10 + $0x18] sm:$0xff] %v1081
    %1136 = vst [vmem:[#allocation10 + $0x20] sm:$0xff] %v1086
    %1137 = vst [vmem:[#allocation10 + $0x28] sm:$0xff] %v1089
    %1138 = vst [vmem:[#allocation10 + $0x30] sm:$0xff] %v1094
    %1139 = vst [vmem:[#allocation10 + $0x38] sm:$0xff] %v1097
    %1140 = vst [vmem:[#allocation10 + $0x40] sm:$0xff] %v1102
    %1141 = vst [vmem:[#allocation10 + $0x48] sm:$0xff] %v1105
    %1142 = vst [vmem:[#allocation10 + $0x50] sm:$0xff] %v1110
    %1143 = vst [vmem:[#allocation10 + $0x58] sm:$0xff] %v1113
    %1144 = vst [vmem:[#allocation10 + $0x60] sm:$0xff] %v1118
    %1145 = vst [vmem:[#allocation10 + $0x68] sm:$0xff] %v1121
    %1146 = vst [vmem:[#allocation10 + $0x70] sm:$0xff] %v1126
    %1147 = vst [vmem:[#allocation10 + $0x78] sm:$0xff] %v1129
    // Predicated region
    $region38: #{tpu_custom_call.1} parent=1 // pred_check
      _
    $region39: #{tpu_custom_call.1} parent=1 // pred_check_branch
      %1149 = sbr.rel (0) target = $region41
    $region40: #{tpu_custom_call.1} parent=1 // pred_region
      %s1151 = ssub.s32 2048, 2048
      %1152 = vsyncadd [#allocation4], %s1151
      %s1153 = sshll.u32 [#allocation10], 4
      %s1154 = int_to_ptr.vmem [resolvable:$true] %s1153
      %1159 = dma.vmem_to_hbm [thread:$0]  %s1154, 2048, %s5, [#allocation4], 128, 128, 8
    $region41: #{tpu_custom_call.1} parent=1 // pred_fallthru
      _
    // Predicated region
    $region42: #{tpu_custom_call.1} parent=1 // pred_check
      _
    $region43: #{tpu_custom_call.1} parent=1 // pred_check_branch
      %1161 = sbr.rel (0) target = $region45
    $region44: #{tpu_custom_call.1} parent=1 // pred_region
      %1162 = dma.done [#allocation4], 2048
    $region45: #{tpu_custom_call.1} parent=1 // pred_fallthru
      _
    %1163 = vsyncpa [#allocation3], 1
    %1164 = vsyncpa [#allocation6], 1
    %1165 = vsyncpa [#allocation9], 1
    %1166 = vsyncpa [#allocation4], 1

</llo_original>
